<compile_context>
chip_gen: v6e
topology: v6e:2x2x1
jax: 0.10.0
libtpu: 0.0.40
codegen_flags: <defaults>
</compile_context>

<pallas_src>
import jax
import jax.numpy as jnp
from jax.experimental import pallas as pl
from jax.experimental.pallas import tpu as pltpu

# ---- model hyper-parameters (small, consistent with the module) ----
NUM_EXPERTS = 4
NUM_CLASSES = 16
NUM_FEATURES = 32          # base_model.num_features
B, C_IN, H, W = 2, 4, 16, 16
P = C_IN * H * W           # flattened pixel dim fed to the feature stand-in


def moe_kernel(xf_ref, wf_ref, bf_ref, wfe_ref, bfe_ref, wc_ref, bc_ref, out_ref):
    # xf_ref: [B, P] f32, wf_ref: [P, F] bf16 (HBM/DMA-halved), bf_ref: [1, F] f32
    x = xf_ref[...]
    wf = wf_ref[...].astype(jnp.float32)          # cast weight operand; accum stays f32

    # --- base_model.forward_features stand-in: feats = x @ Wf + bf ---
    feats = jnp.dot(x, wf, preferred_element_type=jnp.float32) + bf_ref[...]        # [B, F]

    # --- fused gate + experts: ONE MXU push over W_fused[F, E*NC + E] ---
    #   columns [0 : E*NC)        -> expert outputs (expert e at [e*NC:(e+1)*NC))
    #   columns [E*NC : E*NC + E) -> gate logits
    fused = jnp.dot(feats, wfe_ref[...],
                    preferred_element_type=jnp.float32) + bfe_ref[...]              # [B, E*NC+E]

    logits = fused[:, NUM_EXPERTS * NUM_CLASSES:]                                   # [B, E]
    # softmax over experts (torch dim=1); max-subtraction skipped (tiny-scale
    # logits only — 0.05-init weights), denom reciprocal goes to the EUP slot.
    ex = jnp.exp(logits)
    gate = ex * pl.reciprocal(jnp.sum(ex, axis=-1, keepdims=True), approx=True)     # [B, E]

    # --- gate-weighted mix (== matmul(gate^T, stack(expert_outputs)).squeeze(1)) ---
    mixed = gate[:, 0:1] * fused[:, 0:NUM_CLASSES]
    for e in range(1, NUM_EXPERTS):               # tiny static unroll, pure VPU work
        mixed = mixed + gate[:, e:e + 1] * fused[:, e * NUM_CLASSES:(e + 1) * NUM_CLASSES]

    # --- classifier ---
    out = jnp.dot(mixed, wc_ref[...], preferred_element_type=jnp.float32) + bc_ref[...]
    out_ref[...] = out.astype(out_ref.dtype)


def pack_params(params):
    """One-time repack of PyTorch-layout params into the fused kernel layout."""
    wf, bf, wg, bg, we, be, wc, bc = params
    wf_bf16 = wf.astype(jnp.bfloat16)             # dominant HBM transfer -> bf16
    we_flat = jnp.transpose(we, (1, 0, 2)).reshape(NUM_FEATURES, NUM_EXPERTS * NUM_CLASSES)
    be_flat = be.reshape(1, NUM_EXPERTS * NUM_CLASSES)
    wfe = jnp.concatenate([we_flat, wg], axis=1)  # [F, E*NC + E] = [32, 68]
    bfe = jnp.concatenate([be_flat, bg], axis=1)  # [1, E*NC + E]
    return wf_bf16, bf, wfe, bfe, wc, bc


@jax.jit
def mixtures_of_experts(x_nchw, packed):
    """x_nchw: [B, C, H, W] float32 -> [B, NUM_CLASSES] float32."""
    wf_bf16, bf, wfe, bfe, wc, bc = packed
    b = x_nchw.shape[0]
    xf = x_nchw.reshape(b, -1)                    # plain-JAX glue: flatten NCHW row-major
    vmem = pl.BlockSpec(memory_space=pltpu.MemorySpace.VMEM)
    return pl.pallas_call(
        moe_kernel,
        out_shape=jax.ShapeDtypeStruct((b, NUM_CLASSES), jnp.float32),
        # No grid: single program instance; everything (~150 KiB) fits in VMEM
        # on all generations (incl. v7x's 64 MiB), so skip pipeline bookkeeping.
        # For realistic batches, tile the batch (TB=128 on v5e, 256 on v6e/v7x)
        # and mark that axis "parallel" for v7x's two TensorCores.
        in_specs=[vmem] * 7,
        out_specs=vmem,
    )(xf, wf_bf16, bf, wfe, bfe, wc, bc)


def init_params(key):
    ks = jax.random.split(key, 8)
    scale = 0.05
    wf = scale * jax.random.normal(ks[0], (P, NUM_FEATURES), jnp.float32)
    bf = scale * jax.random.normal(ks[1], (1, NUM_FEATURES), jnp.float32)
    wg = scale * jax.random.normal(ks[2], (NUM_FEATURES, NUM_EXPERTS), jnp.float32)
    bg = scale * jax.random.normal(ks[3], (1, NUM_EXPERTS), jnp.float32)
    we = scale * jax.random.normal(ks[4], (NUM_EXPERTS, NUM_FEATURES, NUM_CLASSES), jnp.float32)
    be = scale * jax.random.normal(ks[5], (NUM_EXPERTS, 1, NUM_CLASSES), jnp.float32)
    wc = scale * jax.random.normal(ks[6], (NUM_CLASSES, NUM_CLASSES), jnp.float32)
    bc = scale * jax.random.normal(ks[7], (1, NUM_CLASSES), jnp.float32)
    return wf, bf, wg, bg, we, be, wc, bc


def reference(x_nchw, params, *, bf16_wf=False):
    """Pure-JAX reference mirroring the PyTorch forward exactly."""
    wf, bf, wg, bg, we, be, wc, bc = params
    if bf16_wf:  # same wf rounding the kernel consumes from HBM
        wf = wf.astype(jnp.bfloat16).astype(jnp.float32)
    b = x_nchw.shape[0]
    feats = x_nchw.reshape(b, -1) @ wf + bf                       # forward_features stand-in
    gate_scores = feats @ wg + bg                                 # [B, E]
    expert_outputs = jnp.stack(
        [feats @ we[e] + be[e] for e in range(NUM_EXPERTS)], axis=1)   # [B, E, NC]
    gate_scores = jax.nn.softmax(gate_scores, axis=1)             # softmax over experts
    gate_scores = gate_scores[:, :, None]                         # [B, E, 1]
    mixed = jnp.matmul(jnp.swapaxes(gate_scores, 1, 2), expert_outputs)  # [B, 1, NC]
    mixed = mixed[:, 0, :]                                        # squeeze(1)
    return mixed @ wc + bc


if __name__ == "__main__":
    key = jax.random.PRNGKey(0)
    k_x, k_p = jax.random.split(key)
    x = jax.random.normal(k_x, (B, C_IN, H, W), jnp.float32)
    params = init_params(k_p)
    packed = pack_params(params)

    out = jax.block_until_ready(mixtures_of_experts(x, packed))
    assert out.shape == (B, NUM_CLASSES)

    # bf16_wf=True reference matches the kernel's numerics (wf rounded to bf16);
    # the pure-f32 reference bounds the bf16 weight-storage error.
    ref_same = reference(x, params, bf16_wf=True)
    ref_f32 = reference(x, params, bf16_wf=False)
    err_same = jnp.max(jnp.abs(out - ref_same))
    err_f32 = jnp.max(jnp.abs(out - ref_f32))
    assert jnp.allclose(out, ref_same, atol=3e-3, rtol=3e-3), \
        f"max err vs bf16-weight reference {err_same}"
    assert jnp.allclose(out, ref_f32, atol=3e-2, rtol=3e-2), \
        f"max err vs f32 reference {err_f32}"
    print("KERNEL_OK")
</pallas_src>

<mosaic_0001>
module attributes {stable_mosaic.version = 11 : i64} {
  func.func @moe_kernel(%arg0: memref<2x1024xf32, #tpu.memory_space<vmem>>, %arg1: memref<1024x32xbf16, #tpu.memory_space<vmem>>, %arg2: memref<1x32xf32, #tpu.memory_space<vmem>>, %arg3: memref<32x68xf32, #tpu.memory_space<vmem>>, %arg4: memref<1x68xf32, #tpu.memory_space<vmem>>, %arg5: memref<16x16xf32, #tpu.memory_space<vmem>>, %arg6: memref<1x16xf32, #tpu.memory_space<vmem>>, %arg7: memref<2x16xf32, #tpu.memory_space<vmem>>) attributes {dimension_semantics = [], scalar_prefetch = 0 : i64, scratch_operands = 0 : i64, tpu.core_type = #tpu.core_type<tc>} {
    %c0 = arith.constant 0 : index
    %c0_0 = arith.constant 0 : index
    %0 = vector.load %arg0[%c0, %c0_0] : memref<2x1024xf32, #tpu.memory_space<vmem>>, vector<2x1024xf32>
    %c0_1 = arith.constant 0 : index
    %c0_2 = arith.constant 0 : index
    %1 = vector.load %arg1[%c0_1, %c0_2] : memref<1024x32xbf16, #tpu.memory_space<vmem>>, vector<1024x32xbf16>
    %2 = arith.extf %1 : vector<1024x32xbf16> to vector<1024x32xf32>
    %cst = arith.constant dense<0.000000e+00> : vector<2x32xf32>
    %3 = tpu.matmul %0, %2, %cst {dimension_numbers = #tpu.dot_dimension_numbers<[1], [0], [0], [1], [0, 0, 1, 1], [], []>} : vector<2x1024xf32>, vector<1024x32xf32>, vector<2x32xf32> -> vector<2x32xf32>
    %c0_3 = arith.constant 0 : index
    %c0_4 = arith.constant 0 : index
    %4 = vector.load %arg2[%c0_3, %c0_4] : memref<1x32xf32, #tpu.memory_space<vmem>>, vector<1x32xf32>
    %5 = vector.broadcast %4 : vector<1x32xf32> to vector<2x32xf32>
    %6 = arith.addf %3, %5 : vector<2x32xf32>
    %c0_5 = arith.constant 0 : index
    %c0_6 = arith.constant 0 : index
    %7 = vector.load %arg3[%c0_5, %c0_6] : memref<32x68xf32, #tpu.memory_space<vmem>>, vector<32x68xf32>
    %cst_7 = arith.constant dense<0.000000e+00> : vector<2x68xf32>
    %8 = tpu.matmul %6, %7, %cst_7 {dimension_numbers = #tpu.dot_dimension_numbers<[1], [0], [0], [1], [0, 0, 1, 1], [], []>} : vector<2x32xf32>, vector<32x68xf32>, vector<2x68xf32> -> vector<2x68xf32>
    %c0_8 = arith.constant 0 : index
    %c0_9 = arith.constant 0 : index
    %9 = vector.load %arg4[%c0_8, %c0_9] : memref<1x68xf32, #tpu.memory_space<vmem>>, vector<1x68xf32>
    %10 = vector.broadcast %9 : vector<1x68xf32> to vector<2x68xf32>
    %11 = arith.addf %8, %10 : vector<2x68xf32>
    %12 = vector.extract_strided_slice %11 {offsets = [0, 64], sizes = [2, 4], strides = [1, 1]} : vector<2x68xf32> to vector<2x4xf32>
    %13 = math.exp %12 : vector<2x4xf32>
    %cst_10 = arith.constant dense<0.000000e+00> : vector<2xf32>
    %14 = vector.multi_reduction <add>, %13, %cst_10 [1] : vector<2x4xf32> to vector<2xf32>
    %15 = vector.shape_cast %14 : vector<2xf32> to vector<2x1xf32>
    %16 = tpu.reciprocal %15 {approx = true} : vector<2x1xf32> -> vector<2x1xf32>
    %17 = vector.broadcast %16 : vector<2x1xf32> to vector<2x4xf32>
    %18 = arith.mulf %13, %17 : vector<2x4xf32>
    %19 = vector.extract_strided_slice %18 {offsets = [0, 0], sizes = [2, 1], strides = [1, 1]} : vector<2x4xf32> to vector<2x1xf32>
    %20 = vector.extract_strided_slice %11 {offsets = [0, 0], sizes = [2, 16], strides = [1, 1]} : vector<2x68xf32> to vector<2x16xf32>
    %21 = vector.broadcast %19 : vector<2x1xf32> to vector<2x16xf32>
    %22 = arith.mulf %21, %20 : vector<2x16xf32>
    %23 = vector.extract_strided_slice %18 {offsets = [0, 1], sizes = [2, 1], strides = [1, 1]} : vector<2x4xf32> to vector<2x1xf32>
    %24 = vector.extract_strided_slice %11 {offsets = [0, 16], sizes = [2, 16], strides = [1, 1]} : vector<2x68xf32> to vector<2x16xf32>
    %25 = vector.broadcast %23 : vector<2x1xf32> to vector<2x16xf32>
    %26 = arith.mulf %25, %24 : vector<2x16xf32>
    %27 = arith.addf %22, %26 : vector<2x16xf32>
    %28 = vector.extract_strided_slice %18 {offsets = [0, 2], sizes = [2, 1], strides = [1, 1]} : vector<2x4xf32> to vector<2x1xf32>
    %29 = vector.extract_strided_slice %11 {offsets = [0, 32], sizes = [2, 16], strides = [1, 1]} : vector<2x68xf32> to vector<2x16xf32>
    %30 = vector.broadcast %28 : vector<2x1xf32> to vector<2x16xf32>
    %31 = arith.mulf %30, %29 : vector<2x16xf32>
    %32 = arith.addf %27, %31 : vector<2x16xf32>
    %33 = vector.extract_strided_slice %18 {offsets = [0, 3], sizes = [2, 1], strides = [1, 1]} : vector<2x4xf32> to vector<2x1xf32>
    %34 = vector.extract_strided_slice %11 {offsets = [0, 48], sizes = [2, 16], strides = [1, 1]} : vector<2x68xf32> to vector<2x16xf32>
    %35 = vector.broadcast %33 : vector<2x1xf32> to vector<2x16xf32>
    %36 = arith.mulf %35, %34 : vector<2x16xf32>
    %37 = arith.addf %32, %36 : vector<2x16xf32>
    %c0_11 = arith.constant 0 : index
    %c0_12 = arith.constant 0 : index
    %38 = vector.load %arg5[%c0_11, %c0_12] : memref<16x16xf32, #tpu.memory_space<vmem>>, vector<16x16xf32>
    %cst_13 = arith.constant dense<0.000000e+00> : vector<2x16xf32>
    %39 = tpu.matmul %37, %38, %cst_13 {dimension_numbers = #tpu.dot_dimension_numbers<[1], [0], [0], [1], [0, 0, 1, 1], [], []>} : vector<2x16xf32>, vector<16x16xf32>, vector<2x16xf32> -> vector<2x16xf32>
    %c0_14 = arith.constant 0 : index
    %c0_15 = arith.constant 0 : index
    %40 = vector.load %arg6[%c0_14, %c0_15] : memref<1x16xf32, #tpu.memory_space<vmem>>, vector<1x16xf32>
    %41 = vector.broadcast %40 : vector<1x16xf32> to vector<2x16xf32>
    %42 = arith.addf %39, %41 : vector<2x16xf32>
    %c0_16 = arith.constant 0 : index
    %c0_17 = arith.constant 0 : index
    %43 = vector.load %arg7[%c0_16, %c0_17] : memref<2x16xf32, #tpu.memory_space<vmem>>, vector<2x16xf32>
    tpu.vector_store %arg7[%c0_16, %c0_17], %42 {strides = array<i32>} : memref<2x16xf32, #tpu.memory_space<vmem>>, vector<2x16xf32>,
    return
  }
}

</mosaic_0001>

<llo_original>
// kernel: mixtures_of_experts.1
$region0: #{mixtures_of_experts.1}
  #allocation0 [shape = 'u32[]', space=smem, size = 0x4, offset = 0x4, fixed_abs, tag = 'smem constant byte address 0x4 - core index']
  #allocation1 [shape = 'u32[144,128]{1,0:T(1,128)}', space=vmem, size = 0x12000, scoped, tag = 'internal scratch']
  %s0 = inlined_call_operand.vmem [shape: f32[2,1024], index: 0, kind: input, shape index: {}]
  %s1 = inlined_call_operand.vmem [shape: bf16[1024,32], index: 1, kind: input, shape index: {}]
  %s2 = inlined_call_operand.vmem [shape: f32[1,32], index: 2, kind: input, shape index: {}]
  %s3 = inlined_call_operand.vmem [shape: f32[32,68], index: 3, kind: input, shape index: {}]
  %s4 = inlined_call_operand.vmem [shape: f32[1,68], index: 4, kind: input, shape index: {}]
  %s5 = inlined_call_operand.vmem [shape: f32[16,16], index: 5, kind: input, shape index: {}]
  %s6 = inlined_call_operand.vmem [shape: f32[1,16], index: 6, kind: input, shape index: {}]
  %s7 = inlined_call_operand.hbm [shape: f32[2,16], index: 7, kind: output, shape index: {}]
  %s8 = sld [smem:[#allocation0]]
  $region38: #{mixtures_of_experts.1} parent=0
    _
  %s10 = ssub.s32 1, %s8
  %s11 = scalar_select 0, %s10, %s8
  $region1: #{mixtures_of_experts.1} parent=0
    #allocation2 [shape = 'u8[1024]{0}', space=vmem, size = 0x400, scoped, tag = 'output window, operand 0, single buffered']
    #allocation3 [shape = 's32[1]{0}', space=sflag, size = 0x4, scoped, tag = 'scoped memory for mixtures_of_experts.1']
    %12 = vsyncpa [#allocation3], 0
    // Predicated region
    $region2: #{mixtures_of_experts.1} parent=1 // pred_check
      _
    $region3: #{mixtures_of_experts.1} parent=1 // pred_check_branch
      %14 = sbr.rel (0) target = $region5
    $region4: #{mixtures_of_experts.1} parent=1 // pred_region
      _
    $region5: #{mixtures_of_experts.1} parent=1 // pred_fallthru
      _
    // Predicated region
    $region6: #{mixtures_of_experts.1} parent=1 // pred_check
      _
    $region7: #{mixtures_of_experts.1} parent=1 // pred_check_branch
      %16 = sbr.rel (0) target = $region9
    $region8: #{mixtures_of_experts.1} parent=1 // pred_region
      _
    $region9: #{mixtures_of_experts.1} parent=1 // pred_fallthru
      _
    // Predicated region
    $region10: #{mixtures_of_experts.1} parent=1 // pred_check
      _
    $region11: #{mixtures_of_experts.1} parent=1 // pred_check_branch
      %18 = sbr.rel (0) target = $region13
    $region12: #{mixtures_of_experts.1} parent=1 // pred_region
      _
    $region13: #{mixtures_of_experts.1} parent=1 // pred_fallthru
      _
    // Predicated region
    $region14: #{mixtures_of_experts.1} parent=1 // pred_check
      _
    $region15: #{mixtures_of_experts.1} parent=1 // pred_check_branch
      %20 = sbr.rel (0) target = $region17
    $region16: #{mixtures_of_experts.1} parent=1 // pred_region
      _
    $region17: #{mixtures_of_experts.1} parent=1 // pred_fallthru
      _
    // Predicated region
    $region18: #{mixtures_of_experts.1} parent=1 // pred_check
      _
    $region19: #{mixtures_of_experts.1} parent=1 // pred_check_branch
      %22 = sbr.rel (0) target = $region21
    $region20: #{mixtures_of_experts.1} parent=1 // pred_region
      _
    $region21: #{mixtures_of_experts.1} parent=1 // pred_fallthru
      _
    // Predicated region
    $region22: #{mixtures_of_experts.1} parent=1 // pred_check
      _
    $region23: #{mixtures_of_experts.1} parent=1 // pred_check_branch
      %24 = sbr.rel (0) target = $region25
    $region24: #{mixtures_of_experts.1} parent=1 // pred_region
      _
    $region25: #{mixtures_of_experts.1} parent=1 // pred_fallthru
      _
    // Predicated region
    $region26: #{mixtures_of_experts.1} parent=1 // pred_check
      _
    $region27: #{mixtures_of_experts.1} parent=1 // pred_check_branch
      %26 = sbr.rel (0) target = $region29
    $region28: #{mixtures_of_experts.1} parent=1 // pred_region
      _
    $region29: #{mixtures_of_experts.1} parent=1 // pred_fallthru
      _
    %v27 = vld [vmem:[%s0] sm:$0xff]
    %v28 = vld [vmem:[%s0 + $0x8] sm:$0xff]
    %v29 = vld [vmem:[%s1] sm:$0xf]
    %v30 = vld [vmem:[%s1 + $0x4] sm:$0xf]
    %v31 = vld [vmem:[%s1 + $0x8] sm:$0xf]
    %v32 = vld [vmem:[%s1 + $0xc] sm:$0xf]
    %v33 = vld [vmem:[%s1 + $0x10] sm:$0xf]
    %v34 = vld [vmem:[%s1 + $0x14] sm:$0xf]
    %v35 = vld [vmem:[%s1 + $0x18] sm:$0xf]
    %v36 = vld [vmem:[%s1 + $0x1c] sm:$0xf]
    %v37 = vld [vmem:[%s1 + $0x20] sm:$0xf]
    %v38 = vld [vmem:[%s1 + $0x24] sm:$0xf]
    %v39 = vld [vmem:[%s1 + $0x28] sm:$0xf]
    %v40 = vld [vmem:[%s1 + $0x2c] sm:$0xf]
    %v41 = vld [vmem:[%s1 + $0x30] sm:$0xf]
    %v42 = vld [vmem:[%s1 + $0x34] sm:$0xf]
    %v43 = vld [vmem:[%s1 + $0x38] sm:$0xf]
    %v44 = vld [vmem:[%s1 + $0x3c] sm:$0xf]
    %v45 = vld [vmem:[%s1 + $0x40] sm:$0xf]
    %v46 = vld [vmem:[%s1 + $0x44] sm:$0xf]
    %v47 = vld [vmem:[%s1 + $0x48] sm:$0xf]
    %v48 = vld [vmem:[%s1 + $0x4c] sm:$0xf]
    %v49 = vld [vmem:[%s1 + $0x50] sm:$0xf]
    %v50 = vld [vmem:[%s1 + $0x54] sm:$0xf]
    %v51 = vld [vmem:[%s1 + $0x58] sm:$0xf]
    %v52 = vld [vmem:[%s1 + $0x5c] sm:$0xf]
    %v53 = vld [vmem:[%s1 + $0x60] sm:$0xf]
    %v54 = vld [vmem:[%s1 + $0x64] sm:$0xf]
    %v55 = vld [vmem:[%s1 + $0x68] sm:$0xf]
    %v56 = vld [vmem:[%s1 + $0x6c] sm:$0xf]
    %v57 = vld [vmem:[%s1 + $0x70] sm:$0xf]
    %v58 = vld [vmem:[%s1 + $0x74] sm:$0xf]
    %v59 = vld [vmem:[%s1 + $0x78] sm:$0xf]
    %v60 = vld [vmem:[%s1 + $0x7c] sm:$0xf]
    %v61 = vld [vmem:[%s1 + $0x80] sm:$0xf]
    %v62 = vld [vmem:[%s1 + $0x84] sm:$0xf]
    %v63 = vld [vmem:[%s1 + $0x88] sm:$0xf]
    %v64 = vld [vmem:[%s1 + $0x8c] sm:$0xf]
    %v65 = vld [vmem:[%s1 + $0x90] sm:$0xf]
    %v66 = vld [vmem:[%s1 + $0x94] sm:$0xf]
    %v67 = vld [vmem:[%s1 + $0x98] sm:$0xf]
    %v68 = vld [vmem:[%s1 + $0x9c] sm:$0xf]
    %v69 = vld [vmem:[%s1 + $0xa0] sm:$0xf]
    %v70 = vld [vmem:[%s1 + $0xa4] sm:$0xf]
    %v71 = vld [vmem:[%s1 + $0xa8] sm:$0xf]
    %v72 = vld [vmem:[%s1 + $0xac] sm:$0xf]
    %v73 = vld [vmem:[%s1 + $0xb0] sm:$0xf]
    %v74 = vld [vmem:[%s1 + $0xb4] sm:$0xf]
    %v75 = vld [vmem:[%s1 + $0xb8] sm:$0xf]
    %v76 = vld [vmem:[%s1 + $0xbc] sm:$0xf]
    %v77 = vld [vmem:[%s1 + $0xc0] sm:$0xf]
    %v78 = vld [vmem:[%s1 + $0xc4] sm:$0xf]
    %v79 = vld [vmem:[%s1 + $0xc8] sm:$0xf]
    %v80 = vld [vmem:[%s1 + $0xcc] sm:$0xf]
    %v81 = vld [vmem:[%s1 + $0xd0] sm:$0xf]
    %v82 = vld [vmem:[%s1 + $0xd4] sm:$0xf]
    %v83 = vld [vmem:[%s1 + $0xd8] sm:$0xf]
    %v84 = vld [vmem:[%s1 + $0xdc] sm:$0xf]
    %v85 = vld [vmem:[%s1 + $0xe0] sm:$0xf]
    %v86 = vld [vmem:[%s1 + $0xe4] sm:$0xf]
    %v87 = vld [vmem:[%s1 + $0xe8] sm:$0xf]
    %v88 = vld [vmem:[%s1 + $0xec] sm:$0xf]
    %v89 = vld [vmem:[%s1 + $0xf0] sm:$0xf]
    %v90 = vld [vmem:[%s1 + $0xf4] sm:$0xf]
    %v91 = vld [vmem:[%s1 + $0xf8] sm:$0xf]
    %v92 = vld [vmem:[%s1 + $0xfc] sm:$0xf]
    %v93 = vld [vmem:[%s1 + $0x100] sm:$0xf]
    %v94 = vld [vmem:[%s1 + $0x104] sm:$0xf]
    %v95 = vld [vmem:[%s1 + $0x108] sm:$0xf]
    %v96 = vld [vmem:[%s1 + $0x10c] sm:$0xf]
    %v97 = vld [vmem:[%s1 + $0x110] sm:$0xf]
    %v98 = vld [vmem:[%s1 + $0x114] sm:$0xf]
    %v99 = vld [vmem:[%s1 + $0x118] sm:$0xf]
    %v100 = vld [vmem:[%s1 + $0x11c] sm:$0xf]
    %v101 = vld [vmem:[%s1 + $0x120] sm:$0xf]
    %v102 = vld [vmem:[%s1 + $0x124] sm:$0xf]
    %v103 = vld [vmem:[%s1 + $0x128] sm:$0xf]
    %v104 = vld [vmem:[%s1 + $0x12c] sm:$0xf]
    %v105 = vld [vmem:[%s1 + $0x130] sm:$0xf]
    %v106 = vld [vmem:[%s1 + $0x134] sm:$0xf]
    %v107 = vld [vmem:[%s1 + $0x138] sm:$0xf]
    %v108 = vld [vmem:[%s1 + $0x13c] sm:$0xf]
    %v109 = vld [vmem:[%s1 + $0x140] sm:$0xf]
    %v110 = vld [vmem:[%s1 + $0x144] sm:$0xf]
    %v111 = vld [vmem:[%s1 + $0x148] sm:$0xf]
    %v112 = vld [vmem:[%s1 + $0x14c] sm:$0xf]
    %v113 = vld [vmem:[%s1 + $0x150] sm:$0xf]
    %v114 = vld [vmem:[%s1 + $0x154] sm:$0xf]
    %v115 = vld [vmem:[%s1 + $0x158] sm:$0xf]
    %v116 = vld [vmem:[%s1 + $0x15c] sm:$0xf]
    %v117 = vld [vmem:[%s1 + $0x160] sm:$0xf]
    %v118 = vld [vmem:[%s1 + $0x164] sm:$0xf]
    %v119 = vld [vmem:[%s1 + $0x168] sm:$0xf]
    %v120 = vld [vmem:[%s1 + $0x16c] sm:$0xf]
    %v121 = vld [vmem:[%s1 + $0x170] sm:$0xf]
    %v122 = vld [vmem:[%s1 + $0x174] sm:$0xf]
    %v123 = vld [vmem:[%s1 + $0x178] sm:$0xf]
    %v124 = vld [vmem:[%s1 + $0x17c] sm:$0xf]
    %v125 = vld [vmem:[%s1 + $0x180] sm:$0xf]
    %v126 = vld [vmem:[%s1 + $0x184] sm:$0xf]
    %v127 = vld [vmem:[%s1 + $0x188] sm:$0xf]
    %v128 = vld [vmem:[%s1 + $0x18c] sm:$0xf]
    %v129 = vld [vmem:[%s1 + $0x190] sm:$0xf]
    %v130 = vld [vmem:[%s1 + $0x194] sm:$0xf]
    %v131 = vld [vmem:[%s1 + $0x198] sm:$0xf]
    %v132 = vld [vmem:[%s1 + $0x19c] sm:$0xf]
    %v133 = vld [vmem:[%s1 + $0x1a0] sm:$0xf]
    %v134 = vld [vmem:[%s1 + $0x1a4] sm:$0xf]
    %v135 = vld [vmem:[%s1 + $0x1a8] sm:$0xf]
    %v136 = vld [vmem:[%s1 + $0x1ac] sm:$0xf]
    %v137 = vld [vmem:[%s1 + $0x1b0] sm:$0xf]
    %v138 = vld [vmem:[%s1 + $0x1b4] sm:$0xf]
    %v139 = vld [vmem:[%s1 + $0x1b8] sm:$0xf]
    %v140 = vld [vmem:[%s1 + $0x1bc] sm:$0xf]
    %v141 = vld [vmem:[%s1 + $0x1c0] sm:$0xf]
    %v142 = vld [vmem:[%s1 + $0x1c4] sm:$0xf]
    %v143 = vld [vmem:[%s1 + $0x1c8] sm:$0xf]
    %v144 = vld [vmem:[%s1 + $0x1cc] sm:$0xf]
    %v145 = vld [vmem:[%s1 + $0x1d0] sm:$0xf]
    %v146 = vld [vmem:[%s1 + $0x1d4] sm:$0xf]
    %v147 = vld [vmem:[%s1 + $0x1d8] sm:$0xf]
    %v148 = vld [vmem:[%s1 + $0x1dc] sm:$0xf]
    %v149 = vld [vmem:[%s1 + $0x1e0] sm:$0xf]
    %v150 = vld [vmem:[%s1 + $0x1e4] sm:$0xf]
    %v151 = vld [vmem:[%s1 + $0x1e8] sm:$0xf]
    %v152 = vld [vmem:[%s1 + $0x1ec] sm:$0xf]
    %v153 = vld [vmem:[%s1 + $0x1f0] sm:$0xf]
    %v154 = vld [vmem:[%s1 + $0x1f4] sm:$0xf]
    %v155 = vld [vmem:[%s1 + $0x1f8] sm:$0xf]
    %v156 = vld [vmem:[%s1 + $0x1fc] sm:$0xf]
    %v157 = vunpack.c.l.bf16 %v29
    %v158 = vunpack.c.l.bf16 %v30
    %v159 = vunpack.c.l.bf16 %v31
    %v160 = vunpack.c.l.bf16 %v32
    %v161 = vunpack.c.l.bf16 %v33
    %v162 = vunpack.c.l.bf16 %v34
    %v163 = vunpack.c.l.bf16 %v35
    %v164 = vunpack.c.l.bf16 %v36
    %v165 = vunpack.c.l.bf16 %v37
    %v166 = vunpack.c.l.bf16 %v38
    %v167 = vunpack.c.l.bf16 %v39
    %v168 = vunpack.c.l.bf16 %v40
    %v169 = vunpack.c.l.bf16 %v41
    %v170 = vunpack.c.l.bf16 %v42
    %v171 = vunpack.c.l.bf16 %v43
    %v172 = vunpack.c.l.bf16 %v44
    %v173 = vunpack.c.l.bf16 %v45
    %v174 = vunpack.c.l.bf16 %v46
    %v175 = vunpack.c.l.bf16 %v47
    %v176 = vunpack.c.l.bf16 %v48
    %v177 = vunpack.c.l.bf16 %v49
    %v178 = vunpack.c.l.bf16 %v50
    %v179 = vunpack.c.l.bf16 %v51
    %v180 = vunpack.c.l.bf16 %v52
    %v181 = vunpack.c.l.bf16 %v53
    %v182 = vunpack.c.l.bf16 %v54
    %v183 = vunpack.c.l.bf16 %v55
    %v184 = vunpack.c.l.bf16 %v56
    %v185 = vunpack.c.l.bf16 %v57
    %v186 = vunpack.c.l.bf16 %v58
    %v187 = vunpack.c.l.bf16 %v59
    %v188 = vunpack.c.l.bf16 %v60
    %v189 = vunpack.c.l.bf16 %v61
    %v190 = vunpack.c.l.bf16 %v62
    %v191 = vunpack.c.l.bf16 %v63
    %v192 = vunpack.c.l.bf16 %v64
    %v193 = vunpack.c.l.bf16 %v65
    %v194 = vunpack.c.l.bf16 %v66
    %v195 = vunpack.c.l.bf16 %v67
    %v196 = vunpack.c.l.bf16 %v68
    %v197 = vunpack.c.l.bf16 %v69
    %v198 = vunpack.c.l.bf16 %v70
    %v199 = vunpack.c.l.bf16 %v71
    %v200 = vunpack.c.l.bf16 %v72
    %v201 = vunpack.c.l.bf16 %v73
    %v202 = vunpack.c.l.bf16 %v74
    %v203 = vunpack.c.l.bf16 %v75
    %v204 = vunpack.c.l.bf16 %v76
    %v205 = vunpack.c.l.bf16 %v77
    %v206 = vunpack.c.l.bf16 %v78
    %v207 = vunpack.c.l.bf16 %v79
    %v208 = vunpack.c.l.bf16 %v80
    %v209 = vunpack.c.l.bf16 %v81
    %v210 = vunpack.c.l.bf16 %v82
    %v211 = vunpack.c.l.bf16 %v83
    %v212 = vunpack.c.l.bf16 %v84
    %v213 = vunpack.c.l.bf16 %v85
    %v214 = vunpack.c.l.bf16 %v86
    %v215 = vunpack.c.l.bf16 %v87
    %v216 = vunpack.c.l.bf16 %v88
    %v217 = vunpack.c.l.bf16 %v89
    %v218 = vunpack.c.l.bf16 %v90
    %v219 = vunpack.c.l.bf16 %v91
    %v220 = vunpack.c.l.bf16 %v92
    %v221 = vunpack.c.l.bf16 %v93
    %v222 = vunpack.c.l.bf16 %v94
    %v223 = vunpack.c.l.bf16 %v95
    %v224 = vunpack.c.l.bf16 %v96
    %v225 = vunpack.c.l.bf16 %v97
    %v226 = vunpack.c.l.bf16 %v98
    %v227 = vunpack.c.l.bf16 %v99
    %v228 = vunpack.c.l.bf16 %v100
    %v229 = vunpack.c.l.bf16 %v101
    %v230 = vunpack.c.l.bf16 %v102
    %v231 = vunpack.c.l.bf16 %v103
    %v232 = vunpack.c.l.bf16 %v104
    %v233 = vunpack.c.l.bf16 %v105
    %v234 = vunpack.c.l.bf16 %v106
    %v235 = vunpack.c.l.bf16 %v107
    %v236 = vunpack.c.l.bf16 %v108
    %v237 = vunpack.c.l.bf16 %v109
    %v238 = vunpack.c.l.bf16 %v110
    %v239 = vunpack.c.l.bf16 %v111
    %v240 = vunpack.c.l.bf16 %v112
    %v241 = vunpack.c.l.bf16 %v113
    %v242 = vunpack.c.l.bf16 %v114
    %v243 = vunpack.c.l.bf16 %v115
    %v244 = vunpack.c.l.bf16 %v116
    %v245 = vunpack.c.l.bf16 %v117
    %v246 = vunpack.c.l.bf16 %v118
    %v247 = vunpack.c.l.bf16 %v119
    %v248 = vunpack.c.l.bf16 %v120
    %v249 = vunpack.c.l.bf16 %v121
    %v250 = vunpack.c.l.bf16 %v122
    %v251 = vunpack.c.l.bf16 %v123
    %v252 = vunpack.c.l.bf16 %v124
    %v253 = vunpack.c.l.bf16 %v125
    %v254 = vunpack.c.l.bf16 %v126
    %v255 = vunpack.c.l.bf16 %v127
    %v256 = vunpack.c.l.bf16 %v128
    %v257 = vunpack.c.l.bf16 %v129
    %v258 = vunpack.c.l.bf16 %v130
    %v259 = vunpack.c.l.bf16 %v131
    %v260 = vunpack.c.l.bf16 %v132
    %v261 = vunpack.c.l.bf16 %v133
    %v262 = vunpack.c.l.bf16 %v134
    %v263 = vunpack.c.l.bf16 %v135
    %v264 = vunpack.c.l.bf16 %v136
    %v265 = vunpack.c.l.bf16 %v137
    %v266 = vunpack.c.l.bf16 %v138
    %v267 = vunpack.c.l.bf16 %v139
    %v268 = vunpack.c.l.bf16 %v140
    %v269 = vunpack.c.l.bf16 %v141
    %v270 = vunpack.c.l.bf16 %v142
    %v271 = vunpack.c.l.bf16 %v143
    %v272 = vunpack.c.l.bf16 %v144
    %v273 = vunpack.c.l.bf16 %v145
    %v274 = vunpack.c.l.bf16 %v146
    %v275 = vunpack.c.l.bf16 %v147
    %v276 = vunpack.c.l.bf16 %v148
    %v277 = vunpack.c.l.bf16 %v149
    %v278 = vunpack.c.l.bf16 %v150
    %v279 = vunpack.c.l.bf16 %v151
    %v280 = vunpack.c.l.bf16 %v152
    %v281 = vunpack.c.l.bf16 %v153
    %v282 = vunpack.c.l.bf16 %v154
    %v283 = vunpack.c.l.bf16 %v155
    %v284 = vunpack.c.l.bf16 %v156
    %v285 = vld [vmem:[%s2] sm:$0x1]
    %v287 = vlaneseq
    %v288 = vshrl.u32 %v287, 7
    %v289 = vsub.s32 0, %v288
    %v290 = vrot.slane %v285, %v289
    %v294 = vcombine.high %v27, %v27
    %v296 = vunpack.c.l.s4 1983009808
    %v297 = vunpack.c.0.s8 %v296
    %v298 = vlaneseq
    %v299 = vshrl.u32 %v298, 7
    %v300 = vsub.s32 %v297, %v299
    %v301 = vrot.slane %v27, %v300
    %v303 = vunpack.c.l.s4 1983009808
    %v304 = vunpack.c.0.s8 %v303
    %v305 = vlaneseq
    %v306 = vshrl.u32 %v305, 7
    %v307 = vsub.s32 %v304, %v306
    %v308 = vrot.slane %v294, %v307
    %v309 = vcombine.high %v301, %v301
    %v310 = vcombine.high %v308, %v308
    %v311 = vcombine.high %v28, %v28
    %v313 = vunpack.c.l.s4 1983009808
    %v314 = vunpack.c.0.s8 %v313
    %v315 = vlaneseq
    %v316 = vshrl.u32 %v315, 7
    %v317 = vsub.s32 %v314, %v316
    %v318 = vrot.slane %v28, %v317
    %v320 = vunpack.c.l.s4 1983009808
    %v321 = vunpack.c.0.s8 %v320
    %v322 = vlaneseq
    %v323 = vshrl.u32 %v322, 7
    %v324 = vsub.s32 %v321, %v323
    %v325 = vrot.slane %v311, %v324
    %v326 = vcombine.high %v318, %v318
    %v327 = vcombine.high %v325, %v325
    %336 = vmatprep.subr.mxu0 0.0
    %337 = vmatpush1.msra.mxu0 %v172
    %338 = vmatprep.subr.mxu0 0.0
    %339 = vmatpush1.msra.mxu0 %v171
    %340 = vmatprep.subr.mxu0 0.0
    %341 = vmatpush1.msra.mxu0 %v170
    %342 = vmatprep.subr.mxu0 0.0
    %343 = vmatpush1.msra.mxu0 %v169
    %344 = vmatprep.subr.mxu0 0.0
    %345 = vmatpush1.msra.mxu0 %v168
    %346 = vmatprep.subr.mxu0 0.0
    %347 = vmatpush1.msra.mxu0 %v167
    %348 = vmatprep.subr.mxu0 0.0
    %349 = vmatpush1.msra.mxu0 %v166
    %350 = vmatprep.subr.mxu0 0.0
    %351 = vmatpush1.msra.mxu0 %v165
    %352 = vmatprep.subr.mxu0 0.0
    %353 = vmatpush1.msra.mxu0 %v164
    %354 = vmatprep.subr.mxu0 0.0
    %355 = vmatpush1.msra.mxu0 %v163
    %356 = vmatprep.subr.mxu0 0.0
    %357 = vmatpush1.msra.mxu0 %v162
    %358 = vmatprep.subr.mxu0 0.0
    %359 = vmatpush1.msra.mxu0 %v161
    %360 = vmatprep.subr.mxu0 0.0
    %361 = vmatpush1.msra.mxu0 %v160
    %362 = vmatprep.subr.mxu0 0.0
    %363 = vmatpush1.msra.mxu0 %v159
    %364 = vmatprep.subr.mxu0 0.0
    %365 = vmatpush1.msra.mxu0 %v158
    %366 = vmatprep.subr.mxu0 0.0
    %367 = vmatpush1.msra.mxu0 %v157
    %368 = vmatprep.subr.mxu0 0.0
    %369 = vmatpush2.msra.mxu0 %v188
    %370 = vmatprep.subr.mxu0 0.0
    %371 = vmatpush2.msra.mxu0 %v187
    %372 = vmatprep.subr.mxu0 0.0
    %373 = vmatpush2.msra.mxu0 %v186
    %374 = vmatprep.subr.mxu0 0.0
    %375 = vmatpush2.msra.mxu0 %v185
    %376 = vmatprep.subr.mxu0 0.0
    %377 = vmatpush2.msra.mxu0 %v184
    %378 = vmatprep.subr.mxu0 0.0
    %379 = vmatpush2.msra.mxu0 %v183
    %380 = vmatprep.subr.mxu0 0.0
    %381 = vmatpush2.msra.mxu0 %v182
    %382 = vmatprep.subr.mxu0 0.0
    %383 = vmatpush2.msra.mxu0 %v181
    %384 = vmatprep.subr.mxu0 0.0
    %385 = vmatpush2.msra.mxu0 %v180
    %386 = vmatprep.subr.mxu0 0.0
    %387 = vmatpush2.msra.mxu0 %v179
    %388 = vmatprep.subr.mxu0 0.0
    %389 = vmatpush2.msra.mxu0 %v178
    %390 = vmatprep.subr.mxu0 0.0
    %391 = vmatpush2.msra.mxu0 %v177
    %392 = vmatprep.subr.mxu0 0.0
    %393 = vmatpush2.msra.mxu0 %v176
    %394 = vmatprep.subr.mxu0 0.0
    %395 = vmatpush2.msra.mxu0 %v175
    %396 = vmatprep.subr.mxu0 0.0
    %397 = vmatpush2.msra.mxu0 %v174
    %398 = vmatprep.subr.mxu0 0.0
    %399 = vmatpush2.msra.mxu0 %v173
    %400 = vmatprep.mubr.f32.mxu0 %v309
    %401 = vmatmul.mubr.f32.gmra.mxu0 %v301
    %v402 = vpop.f32.mrf.mxu0
    %v403 = vadd.f32 %v290, %v402
    %v404 = vpop.f32.mrf.mxu0
    %405 = vdwg.mxu0
    %406 = vmatprep.subr.mxu0 0.0
    %407 = vmatpush1.msra.mxu0 %v204
    %408 = vmatprep.subr.mxu0 0.0
    %409 = vmatpush1.msra.mxu0 %v203
    %410 = vmatprep.subr.mxu0 0.0
    %411 = vmatpush1.msra.mxu0 %v202
    %412 = vmatprep.subr.mxu0 0.0
    %413 = vmatpush1.msra.mxu0 %v201
    %414 = vmatprep.subr.mxu0 0.0
    %415 = vmatpush1.msra.mxu0 %v200
    %416 = vmatprep.subr.mxu0 0.0
    %417 = vmatpush1.msra.mxu0 %v199
    %418 = vmatprep.subr.mxu0 0.0
    %419 = vmatpush1.msra.mxu0 %v198
    %420 = vmatprep.subr.mxu0 0.0
    %421 = vmatpush1.msra.mxu0 %v197
    %422 = vmatprep.subr.mxu0 0.0
    %423 = vmatpush1.msra.mxu0 %v196
    %424 = vmatprep.subr.mxu0 0.0
    %425 = vmatpush1.msra.mxu0 %v195
    %426 = vmatprep.subr.mxu0 0.0
    %427 = vmatpush1.msra.mxu0 %v194
    %428 = vmatprep.subr.mxu0 0.0
    %429 = vmatpush1.msra.mxu0 %v193
    %430 = vmatprep.subr.mxu0 0.0
    %431 = vmatpush1.msra.mxu0 %v192
    %432 = vmatprep.subr.mxu0 0.0
    %433 = vmatpush1.msra.mxu0 %v191
    %434 = vmatprep.subr.mxu0 0.0
    %435 = vmatpush1.msra.mxu0 %v190
    %436 = vmatprep.subr.mxu0 0.0
    %437 = vmatpush1.msra.mxu0 %v189
    %438 = vmatprep.subr.mxu0 0.0
    %439 = vmatpush2.msra.mxu0 %v220
    %440 = vmatprep.subr.mxu0 0.0
    %441 = vmatpush2.msra.mxu0 %v219
    %442 = vmatprep.subr.mxu0 0.0
    %443 = vmatpush2.msra.mxu0 %v218
    %444 = vmatprep.subr.mxu0 0.0
    %445 = vmatpush2.msra.mxu0 %v217
    %446 = vmatprep.subr.mxu0 0.0
    %447 = vmatpush2.msra.mxu0 %v216
    %448 = vmatprep.subr.mxu0 0.0
    %449 = vmatpush2.msra.mxu0 %v215
    %450 = vmatprep.subr.mxu0 0.0
    %451 = vmatpush2.msra.mxu0 %v214
    %452 = vmatprep.subr.mxu0 0.0
    %453 = vmatpush2.msra.mxu0 %v213
    %454 = vmatprep.subr.mxu0 0.0
    %455 = vmatpush2.msra.mxu0 %v212
    %456 = vmatprep.subr.mxu0 0.0
    %457 = vmatpush2.msra.mxu0 %v211
    %458 = vmatprep.subr.mxu0 0.0
    %459 = vmatpush2.msra.mxu0 %v210
    %460 = vmatprep.subr.mxu0 0.0
    %461 = vmatpush2.msra.mxu0 %v209
    %462 = vmatprep.subr.mxu0 0.0
    %463 = vmatpush2.msra.mxu0 %v208
    %464 = vmatprep.subr.mxu0 0.0
    %465 = vmatpush2.msra.mxu0 %v207
    %466 = vmatprep.subr.mxu0 0.0
    %467 = vmatpush2.msra.mxu0 %v206
    %468 = vmatprep.subr.mxu0 0.0
    %469 = vmatpush2.msra.mxu0 %v205
    %470 = vmatprep.mubr.f32.mxu0 %v310
    %471 = vmatmul.mubr.f32.gmra.mxu0 %v308
    %v472 = vpop.f32.mrf.mxu0
    %v473 = vadd.f32 %v403, %v472
    %v474 = vpop.f32.mrf.mxu0
    %475 = vdwg.mxu0
    %476 = vmatprep.subr.mxu0 0.0
    %477 = vmatpush1.msra.mxu0 %v236
    %478 = vmatprep.subr.mxu0 0.0
    %479 = vmatpush1.msra.mxu0 %v235
    %480 = vmatprep.subr.mxu0 0.0
    %481 = vmatpush1.msra.mxu0 %v234
    %482 = vmatprep.subr.mxu0 0.0
    %483 = vmatpush1.msra.mxu0 %v233
    %484 = vmatprep.subr.mxu0 0.0
    %485 = vmatpush1.msra.mxu0 %v232
    %486 = vmatprep.subr.mxu0 0.0
    %487 = vmatpush1.msra.mxu0 %v231
    %488 = vmatprep.subr.mxu0 0.0
    %489 = vmatpush1.msra.mxu0 %v230
    %490 = vmatprep.subr.mxu0 0.0
    %491 = vmatpush1.msra.mxu0 %v229
    %492 = vmatprep.subr.mxu0 0.0
    %493 = vmatpush1.msra.mxu0 %v228
    %494 = vmatprep.subr.mxu0 0.0
    %495 = vmatpush1.msra.mxu0 %v227
    %496 = vmatprep.subr.mxu0 0.0
    %497 = vmatpush1.msra.mxu0 %v226
    %498 = vmatprep.subr.mxu0 0.0
    %499 = vmatpush1.msra.mxu0 %v225
    %500 = vmatprep.subr.mxu0 0.0
    %501 = vmatpush1.msra.mxu0 %v224
    %502 = vmatprep.subr.mxu0 0.0
    %503 = vmatpush1.msra.mxu0 %v223
    %504 = vmatprep.subr.mxu0 0.0
    %505 = vmatpush1.msra.mxu0 %v222
    %506 = vmatprep.subr.mxu0 0.0
    %507 = vmatpush1.msra.mxu0 %v221
    %508 = vmatprep.subr.mxu0 0.0
    %509 = vmatpush2.msra.mxu0 %v252
    %510 = vmatprep.subr.mxu0 0.0
    %511 = vmatpush2.msra.mxu0 %v251
    %512 = vmatprep.subr.mxu0 0.0
    %513 = vmatpush2.msra.mxu0 %v250
    %514 = vmatprep.subr.mxu0 0.0
    %515 = vmatpush2.msra.mxu0 %v249
    %516 = vmatprep.subr.mxu0 0.0
    %517 = vmatpush2.msra.mxu0 %v248
    %518 = vmatprep.subr.mxu0 0.0
    %519 = vmatpush2.msra.mxu0 %v247
    %520 = vmatprep.subr.mxu0 0.0
    %521 = vmatpush2.msra.mxu0 %v246
    %522 = vmatprep.subr.mxu0 0.0
    %523 = vmatpush2.msra.mxu0 %v245
    %524 = vmatprep.subr.mxu0 0.0
    %525 = vmatpush2.msra.mxu0 %v244
    %526 = vmatprep.subr.mxu0 0.0
    %527 = vmatpush2.msra.mxu0 %v243
    %528 = vmatprep.subr.mxu0 0.0
    %529 = vmatpush2.msra.mxu0 %v242
    %530 = vmatprep.subr.mxu0 0.0
    %531 = vmatpush2.msra.mxu0 %v241
    %532 = vmatprep.subr.mxu0 0.0
    %533 = vmatpush2.msra.mxu0 %v240
    %534 = vmatprep.subr.mxu0 0.0
    %535 = vmatpush2.msra.mxu0 %v239
    %536 = vmatprep.subr.mxu0 0.0
    %537 = vmatpush2.msra.mxu0 %v238
    %538 = vmatprep.subr.mxu0 0.0
    %539 = vmatpush2.msra.mxu0 %v237
    %540 = vmatprep.mubr.f32.mxu0 %v326
    %541 = vmatmul.mubr.f32.gmra.mxu0 %v318
    %v542 = vpop.f32.mrf.mxu0
    %v543 = vadd.f32 %v473, %v542
    %v544 = vpop.f32.mrf.mxu0
    %545 = vdwg.mxu0
    %546 = vmatprep.subr.mxu0 0.0
    %547 = vmatpush1.msra.mxu0 %v268
    %548 = vmatprep.subr.mxu0 0.0
    %549 = vmatpush1.msra.mxu0 %v267
    %550 = vmatprep.subr.mxu0 0.0
    %551 = vmatpush1.msra.mxu0 %v266
    %552 = vmatprep.subr.mxu0 0.0
    %553 = vmatpush1.msra.mxu0 %v265
    %554 = vmatprep.subr.mxu0 0.0
    %555 = vmatpush1.msra.mxu0 %v264
    %556 = vmatprep.subr.mxu0 0.0
    %557 = vmatpush1.msra.mxu0 %v263
    %558 = vmatprep.subr.mxu0 0.0
    %559 = vmatpush1.msra.mxu0 %v262
    %560 = vmatprep.subr.mxu0 0.0
    %561 = vmatpush1.msra.mxu0 %v261
    %562 = vmatprep.subr.mxu0 0.0
    %563 = vmatpush1.msra.mxu0 %v260
    %564 = vmatprep.subr.mxu0 0.0
    %565 = vmatpush1.msra.mxu0 %v259
    %566 = vmatprep.subr.mxu0 0.0
    %567 = vmatpush1.msra.mxu0 %v258
    %568 = vmatprep.subr.mxu0 0.0
    %569 = vmatpush1.msra.mxu0 %v257
    %570 = vmatprep.subr.mxu0 0.0
    %571 = vmatpush1.msra.mxu0 %v256
    %572 = vmatprep.subr.mxu0 0.0
    %573 = vmatpush1.msra.mxu0 %v255
    %574 = vmatprep.subr.mxu0 0.0
    %575 = vmatpush1.msra.mxu0 %v254
    %576 = vmatprep.subr.mxu0 0.0
    %577 = vmatpush1.msra.mxu0 %v253
    %578 = vmatprep.subr.mxu0 0.0
    %579 = vmatpush2.msra.mxu0 %v284
    %580 = vmatprep.subr.mxu0 0.0
    %581 = vmatpush2.msra.mxu0 %v283
    %582 = vmatprep.subr.mxu0 0.0
    %583 = vmatpush2.msra.mxu0 %v282
    %584 = vmatprep.subr.mxu0 0.0
    %585 = vmatpush2.msra.mxu0 %v281
    %586 = vmatprep.subr.mxu0 0.0
    %587 = vmatpush2.msra.mxu0 %v280
    %588 = vmatprep.subr.mxu0 0.0
    %589 = vmatpush2.msra.mxu0 %v279
    %590 = vmatprep.subr.mxu0 0.0
    %591 = vmatpush2.msra.mxu0 %v278
    %592 = vmatprep.subr.mxu0 0.0
    %593 = vmatpush2.msra.mxu0 %v277
    %594 = vmatprep.subr.mxu0 0.0
    %595 = vmatpush2.msra.mxu0 %v276
    %596 = vmatprep.subr.mxu0 0.0
    %597 = vmatpush2.msra.mxu0 %v275
    %598 = vmatprep.subr.mxu0 0.0
    %599 = vmatpush2.msra.mxu0 %v274
    %600 = vmatprep.subr.mxu0 0.0
    %601 = vmatpush2.msra.mxu0 %v273
    %602 = vmatprep.subr.mxu0 0.0
    %603 = vmatpush2.msra.mxu0 %v272
    %604 = vmatprep.subr.mxu0 0.0
    %605 = vmatpush2.msra.mxu0 %v271
    %606 = vmatprep.subr.mxu0 0.0
    %607 = vmatpush2.msra.mxu0 %v270
    %608 = vmatprep.subr.mxu0 0.0
    %609 = vmatpush2.msra.mxu0 %v269
    %610 = vmatprep.mubr.f32.mxu0 %v327
    %611 = vmatmul.mubr.f32.gmra.mxu0 %v325
    %v612 = vpop.f32.mrf.mxu0
    %v613 = vadd.f32 %v543, %v612
    %v614 = vpop.f32.mrf.mxu0
    %615 = vdwg.mxu0
    %v616 = vld [vmem:[%s3] sm:$0xff]
    %v617 = vld [vmem:[%s3 + $0x8] sm:$0xff]
    %v618 = vld [vmem:[%s3 + $0x10] sm:$0xff]
    %v619 = vld [vmem:[%s3 + $0x18] sm:$0xff]
    %v620 = vld [vmem:[%s4] sm:$0x1]
    %v622 = vlaneseq
    %v623 = vshrl.u32 %v622, 7
    %v624 = vsub.s32 0, %v623
    %v625 = vrot.slane %v620, %v624
    %vm627 = vcmask 261120
    %v629 = vsel %vm627, %v613, 0
    %631 = vmatprep.subr.mxu0 0.0
    %632 = vmatpush1.msra.mxu0 0.0
    %633 = vmatprep.subr.mxu0 0.0
    %634 = vmatpush1.msra.mxu0 0.0
    %635 = vmatprep.subr.mxu0 0.0
    %636 = vmatpush1.msra.mxu0 0.0
    %637 = vmatprep.subr.mxu0 0.0
    %638 = vmatpush1.msra.mxu0 0.0
    %639 = vmatprep.subr.mxu0 0.0
    %640 = vmatpush1.msra.mxu0 0.0
    %641 = vmatprep.subr.mxu0 0.0
    %642 = vmatpush1.msra.mxu0 0.0
    %643 = vmatprep.subr.mxu0 0.0
    %644 = vmatpush1.msra.mxu0 0.0
    %645 = vmatprep.subr.mxu0 0.0
    %646 = vmatpush1.msra.mxu0 0.0
    %647 = vmatprep.subr.mxu0 0.0
    %648 = vmatpush1.msra.mxu0 0.0
    %649 = vmatprep.subr.mxu0 0.0
    %650 = vmatpush1.msra.mxu0 0.0
    %651 = vmatprep.subr.mxu0 0.0
    %652 = vmatpush1.msra.mxu0 0.0
    %653 = vmatprep.subr.mxu0 0.0
    %654 = vmatpush1.msra.mxu0 0.0
    %655 = vmatprep.subr.mxu0 0.0
    %656 = vmatpush1.msra.mxu0 %v619
    %657 = vmatprep.subr.mxu0 0.0
    %658 = vmatpush1.msra.mxu0 %v618
    %659 = vmatprep.subr.mxu0 0.0
    %660 = vmatpush1.msra.mxu0 %v617
    %661 = vmatprep.subr.mxu0 0.0
    %662 = vmatpush1.msra.mxu0 %v616
    %663 = vmatprep.subr.mxu0 0.0
    %664 = vmatpush2.msra.mxu0 0.0
    %665 = vmatprep.subr.mxu0 0.0
    %666 = vmatpush2.msra.mxu0 0.0
    %667 = vmatprep.subr.mxu0 0.0
    %668 = vmatpush2.msra.mxu0 0.0
    %669 = vmatprep.subr.mxu0 0.0
    %670 = vmatpush2.msra.mxu0 0.0
    %671 = vmatprep.subr.mxu0 0.0
    %672 = vmatpush2.msra.mxu0 0.0
    %673 = vmatprep.subr.mxu0 0.0
    %674 = vmatpush2.msra.mxu0 0.0
    %675 = vmatprep.subr.mxu0 0.0
    %676 = vmatpush2.msra.mxu0 0.0
    %677 = vmatprep.subr.mxu0 0.0
    %678 = vmatpush2.msra.mxu0 0.0
    %679 = vmatprep.subr.mxu0 0.0
    %680 = vmatpush2.msra.mxu0 0.0
    %681 = vmatprep.subr.mxu0 0.0
    %682 = vmatpush2.msra.mxu0 0.0
    %683 = vmatprep.subr.mxu0 0.0
    %684 = vmatpush2.msra.mxu0 0.0
    %685 = vmatprep.subr.mxu0 0.0
    %686 = vmatpush2.msra.mxu0 0.0
    %687 = vmatprep.subr.mxu0 0.0
    %688 = vmatpush2.msra.mxu0 0.0
    %689 = vmatprep.subr.mxu0 0.0
    %690 = vmatpush2.msra.mxu0 0.0
    %691 = vmatprep.subr.mxu0 0.0
    %692 = vmatpush2.msra.mxu0 0.0
    %693 = vmatprep.subr.mxu0 0.0
    %694 = vmatpush2.msra.mxu0 0.0
    %695 = vmatprep.mubr.f32.mxu0 0.0
    %696 = vmatmul.mubr.f32.gmra.mxu0 %v629
    %v697 = vpop.f32.mrf.mxu0
    %v698 = vadd.f32 %v625, %v697
    %v699 = vpop.f32.mrf.mxu0
    %700 = vdwg.mxu0
    %v701 = vmul.f32 %v698, 1.442695
    %v702 = vpow.pop %v701
    %704 = vrot.lane.b32.xlu0 %v702, 64
    %v705 = vpop.permute.xlu0 %704
    %vm707 = vcmask 25600
    %v708 = vsel %vm707, %v705, 0.0
    %709 = vadd.xlane.f32.xlu0 %v708
    %v710 = vpop.xlane.xlu0 %709
    %v711 = vrcp.pop %v710
    %v712 = vmul.f32 %v702, %v711
    %714 = vset.pattern.permute.xlu0 64
    %715 = vperm.xlu0 %714, %v712
    %v716 = vpop.permute.xlu0 %715
    %v718 = vmul.f32 %v716, %v698
    %719 = vset.pattern.permute.xlu0 65
    %720 = vperm.xlu0 %719, %v712
    %v721 = vpop.permute.xlu0 %720
    %v723 = vmul.f32 %v721, %v698
    %725 = vrot.lane.b32.xlu0 %v723, 112
    %v726 = vpop.permute.xlu0 %725
    %v728 = vadd.f32 %v718, %v726
    %729 = vset.pattern.permute.xlu0 66
    %730 = vperm.xlu0 %729, %v712
    %v731 = vpop.permute.xlu0 %730
    %v733 = vmul.f32 %v731, %v698
    %735 = vrot.lane.b32.xlu0 %v733, 96
    %v736 = vpop.permute.xlu0 %735
    %v738 = vadd.f32 %v728, %v736
    %739 = vset.pattern.permute.xlu0 67
    %740 = vperm.xlu0 %739, %v712
    %v741 = vpop.permute.xlu0 %740
    %v743 = vmul.f32 %v741, %v698
    %745 = vrot.lane.b32.xlu0 %v743, 80
    %v746 = vpop.permute.xlu0 %745
    %v748 = vadd.f32 %v738, %v746
    %v749 = vld [vmem:[%s5] sm:$0xff]
    %v750 = vld [vmem:[%s5 + $0x8] sm:$0xff]
    %v751 = vld [vmem:[%s6] sm:$0x1]
    %v753 = vlaneseq
    %v754 = vshrl.u32 %v753, 7
    %v755 = vsub.s32 0, %v754
    %v756 = vrot.slane %v751, %v755
    %vm758 = vcmask 130048
    %v760 = vsel %vm758, %v748, 0
    %762 = vmatprep.subr.mxu0 0.0
    %763 = vmatpush1.msra.mxu0 0.0
    %764 = vmatprep.subr.mxu0 0.0
    %765 = vmatpush1.msra.mxu0 0.0
    %766 = vmatprep.subr.mxu0 0.0
    %767 = vmatpush1.msra.mxu0 0.0
    %768 = vmatprep.subr.mxu0 0.0
    %769 = vmatpush1.msra.mxu0 0.0
    %770 = vmatprep.subr.mxu0 0.0
    %771 = vmatpush1.msra.mxu0 0.0
    %772 = vmatprep.subr.mxu0 0.0
    %773 = vmatpush1.msra.mxu0 0.0
    %774 = vmatprep.subr.mxu0 0.0
    %775 = vmatpush1.msra.mxu0 0.0
    %776 = vmatprep.subr.mxu0 0.0
    %777 = vmatpush1.msra.mxu0 0.0
    %778 = vmatprep.subr.mxu0 0.0
    %779 = vmatpush1.msra.mxu0 0.0
    %780 = vmatprep.subr.mxu0 0.0
    %781 = vmatpush1.msra.mxu0 0.0
    %782 = vmatprep.subr.mxu0 0.0
    %783 = vmatpush1.msra.mxu0 0.0
    %784 = vmatprep.subr.mxu0 0.0
    %785 = vmatpush1.msra.mxu0 0.0
    %786 = vmatprep.subr.mxu0 0.0
    %787 = vmatpush1.msra.mxu0 0.0
    %788 = vmatprep.subr.mxu0 0.0
    %789 = vmatpush1.msra.mxu0 0.0
    %790 = vmatprep.subr.mxu0 0.0
    %791 = vmatpush1.msra.mxu0 %v750
    %792 = vmatprep.subr.mxu0 0.0
    %793 = vmatpush1.msra.mxu0 %v749
    %794 = vmatprep.subr.mxu0 0.0
    %795 = vmatpush2.msra.mxu0 0.0
    %796 = vmatprep.subr.mxu0 0.0
    %797 = vmatpush2.msra.mxu0 0.0
    %798 = vmatprep.subr.mxu0 0.0
    %799 = vmatpush2.msra.mxu0 0.0
    %800 = vmatprep.subr.mxu0 0.0
    %801 = vmatpush2.msra.mxu0 0.0
    %802 = vmatprep.subr.mxu0 0.0
    %803 = vmatpush2.msra.mxu0 0.0
    %804 = vmatprep.subr.mxu0 0.0
    %805 = vmatpush2.msra.mxu0 0.0
    %806 = vmatprep.subr.mxu0 0.0
    %807 = vmatpush2.msra.mxu0 0.0
    %808 = vmatprep.subr.mxu0 0.0
    %809 = vmatpush2.msra.mxu0 0.0
    %810 = vmatprep.subr.mxu0 0.0
    %811 = vmatpush2.msra.mxu0 0.0
    %812 = vmatprep.subr.mxu0 0.0
    %813 = vmatpush2.msra.mxu0 0.0
    %814 = vmatprep.subr.mxu0 0.0
    %815 = vmatpush2.msra.mxu0 0.0
    %816 = vmatprep.subr.mxu0 0.0
    %817 = vmatpush2.msra.mxu0 0.0
    %818 = vmatprep.subr.mxu0 0.0
    %819 = vmatpush2.msra.mxu0 0.0
    %820 = vmatprep.subr.mxu0 0.0
    %821 = vmatpush2.msra.mxu0 0.0
    %822 = vmatprep.subr.mxu0 0.0
    %823 = vmatpush2.msra.mxu0 0.0
    %824 = vmatprep.subr.mxu0 0.0
    %825 = vmatpush2.msra.mxu0 0.0
    %826 = vmatprep.mubr.f32.mxu0 0.0
    %827 = vmatmul.mubr.f32.gmra.mxu0 %v760
    %v828 = vpop.f32.mrf.mxu0
    %v829 = vadd.f32 %v756, %v828
    %v830 = vpop.f32.mrf.mxu0
    %831 = vdwg.mxu0
    %vm832 = vcmask 123904
    %833 = vst.msk [vmem:[#allocation2] sm:$0x3] %vm832, %v829
    // Predicated region
    $region30: #{mixtures_of_experts.1} parent=1 // pred_check
      _
    $region31: #{mixtures_of_experts.1} parent=1 // pred_check_branch
      %835 = sbr.rel (0) target = $region33
    $region32: #{mixtures_of_experts.1} parent=1 // pred_region
      %s837 = ssub.s32 32, 32
      %838 = vsyncadd [#allocation3], %s837
      %s840 = sshll.u32 [#allocation2], 4
      %s841 = int_to_ptr.vmem [resolvable:$true] %s840
      %843 = dma.vmem_to_hbm [thread:$0]  %s841, 32, %s7, [#allocation3]
    $region33: #{mixtures_of_experts.1} parent=1 // pred_fallthru
      _
    // Predicated region
    $region34: #{mixtures_of_experts.1} parent=1 // pred_check
      _
    $region35: #{mixtures_of_experts.1} parent=1 // pred_check_branch
      %845 = sbr.rel (0) target = $region37
    $region36: #{mixtures_of_experts.1} parent=1 // pred_region
      %846 = dma.done [#allocation3], 32
    $region37: #{mixtures_of_experts.1} parent=1 // pred_fallthru
      _
    %847 = vsyncpa [#allocation3], 1

</llo_original>
